<compile_context>
chip_gen: v7x
topology: tpu7x:2x2x1
jax: 0.10.0
libtpu: 0.0.40
codegen_flags: <defaults>
</compile_context>

<pallas_src>
import functools

import jax
import jax.numpy as jnp
from jax.experimental import pallas as pl
from jax.experimental.pallas import tpu as pltpu


# ----------------------------- Pallas kernel ------------------------------- #

def _fused_kernel(x_ref, w_ref, b_ref, scores_ref, ploss_ref=None, *,
                  training=True):
    """Classifier GEMV + (optionally) per-group CE loss for target label 0."""
    # ---- classifier logits on VPU/XLU (f32 accumulation, no MXU) -----------
    x = x_ref[...].astype(jnp.float32)                    # (TB, G, H)
    w = w_ref[...].astype(jnp.float32)                    # (1, H), lane-dense
    s = jnp.sum(x * w[None, :, :], axis=-1) + b_ref[0, 0]  # (TB, G) f32
    scores_ref[...] = s.astype(scores_ref.dtype)

    # ---- grouped cross-entropy, target 0: lse(s) - s[:, 0] -----------------
    if training:                                          # compile-time gate
        m = jnp.max(s, axis=-1, keepdims=True)            # (TB, 1)
        lse = jnp.log(jnp.sum(jnp.exp(s - m), axis=-1, keepdims=True)) + m
        ploss_ref[...] = lse - s[:, :1]                   # per-group CE (TB, 1)


# ------------------------------ tiling helper ------------------------------ #

def _round_up(x, m):
    return ((x + m - 1) // m) * m


def _tile_and_vmem(B, G, H, itemsize):
    """Generation-aware batch-tile size and VMEM limit."""
    try:
        vmem_cap = int(pltpu.get_tpu_info().vmem_capacity_bytes)
    except Exception:                                      # pragma: no cover
        vmem_cap = 64 << 20                                # conservative (v7x)

    if vmem_cap >= (100 << 20):        # v5e / v6e: 128 MiB physical VMEM
        tile_budget, vmem_hard_cap = 12 << 20, 56 << 20
    else:                              # v7x: 64 MiB physical VMEM per TC
        tile_budget, vmem_hard_cap = 8 << 20, 36 << 20

    # VMEM footprint of one batch row of the X block: G sits on the sublane
    # axis (round up to the dtype's sublane tile), H on the lane axis.
    sublane = 8 * max(1, 4 // max(1, itemsize))            # f32: 8, bf16: 16
    bytes_per_row = _round_up(G, sublane) * _round_up(H, 128) * itemsize

    if B <= 8:
        tb = B                                             # block == full dim
    else:
        tb = max(8, (tile_budget // max(1, bytes_per_row)) // 8 * 8)
        tb = min(tb, (B // 8) * 8)                         # 8-aligned, <= B

    tile_bytes = tb * bytes_per_row
    # 2x for X double-buffering + slack for outputs / weight row.
    vmem_limit = int(min(vmem_hard_cap, max(16 << 20, 2 * tile_bytes + (4 << 20))))
    return tb, vmem_limit


# ------------------------------ Python wrapper ------------------------------ #

def cross_encoder_forward(x, w, b, *, batch_size, group_size, training=True):
    """Mirror CrossEncoder.forward.

    x: (B*G, H) pooled features (stand-in for hf_model's pooled output); kept
       in its HBM dtype (e.g. bf16) -- the kernel upcasts on load.
    w: (H, 1) classifier weight, b: (1, 1) classifier bias.
    Returns (loss, logits) when training, else logits of shape (B*G, 1).
    """
    BG, H = x.shape
    B, G = batch_size, group_size
    assert BG == B * G

    xg = x.reshape(B, G, H)                        # group axis -> score lanes
    w_row = jnp.asarray(w).reshape(1, H)           # lane-dense weight row
    b2 = jnp.asarray(b, jnp.float32).reshape(1, 1)

    TB, vmem_limit = _tile_and_vmem(B, G, H, xg.dtype.itemsize)
    num_blocks = pl.cdiv(B, TB)                    # boundary block handled by Pallas

    kernel = functools.partial(_fused_kernel, training=training)

    in_specs = [
        pl.BlockSpec((TB, G, H), lambda i: (i, 0, 0)),             # X tiles
        pl.BlockSpec((1, H), lambda i: (0, 0)),                    # weight row
        pl.BlockSpec(memory_space=pltpu.MemorySpace.SMEM),         # bias scalar
    ]
    scores_spec = pl.BlockSpec((TB, G), lambda i: (i, 0))
    compiler_params = pltpu.CompilerParams(
        # No cross-step carry -> grid axis is parallel (megacore on v7x).
        dimension_semantics=("parallel",),
        vmem_limit_bytes=vmem_limit,
    )

    if training:
        scores, per_group_loss = pl.pallas_call(
            kernel,
            out_shape=(
                jax.ShapeDtypeStruct((B, G), jnp.float32),   # group scores
                jax.ShapeDtypeStruct((B, 1), jnp.float32),   # per-group CE
            ),
            grid=(num_blocks,),
            in_specs=in_specs,
            out_specs=(scores_spec, pl.BlockSpec((TB, 1), lambda i: (i, 0))),
            compiler_params=compiler_params,
        )(xg, w_row, b2)
        loss = jnp.sum(per_group_loss) / B                   # mean over groups
        logits = scores.reshape(BG, 1)
        return loss, logits

    scores = pl.pallas_call(
        kernel,
        out_shape=jax.ShapeDtypeStruct((B, G), jnp.float32),
        grid=(num_blocks,),
        in_specs=in_specs,
        out_specs=scores_spec,
        compiler_params=compiler_params,
    )(xg, w_row, b2)
    return scores.reshape(BG, 1)


# --------------------------------- Demo ------------------------------------ #

if __name__ == "__main__":
    # per_device_train_batch_size = 2, train_group_size = 8, hidden = 32
    B, G, H = 2, 8, 32
    BG = B * G

    key = jax.random.PRNGKey(0)
    kx, kw = jax.random.split(key)

    # Synthetic "hf_model" pooled features (kept in bf16 in HBM) and head params.
    x = jax.random.normal(kx, (BG, H), dtype=jnp.float32).astype(jnp.bfloat16)
    w = jax.random.normal(kw, (H, 1), dtype=jnp.float32) * 0.02
    b = jnp.zeros((1, 1), dtype=jnp.float32)

    loss, logits = cross_encoder_forward(
        x, w, b, batch_size=B, group_size=G, training=True)
    jax.block_until_ready((loss, logits))

    # Reference in plain JAX (same bf16 -> f32 upcast + reduce as the kernel).
    x_f32 = x.astype(jnp.float32)
    ref_logits = jnp.sum(x_f32 * w.reshape(1, H), axis=-1, keepdims=True) + b
    ref_scores = ref_logits.reshape(B, G)
    ref_loss = jnp.mean(jax.nn.logsumexp(ref_scores, axis=-1) - ref_scores[:, 0])
    assert jnp.allclose(logits, ref_logits, atol=1e-5), "logits mismatch"
    assert jnp.allclose(loss, ref_loss, atol=1e-5), "loss mismatch"

    # Eval path (returns just the logits, like the module's else-branch).
    eval_logits = cross_encoder_forward(
        x, w, b, batch_size=B, group_size=G, training=False)
    jax.block_until_ready(eval_logits)
    assert jnp.allclose(eval_logits, ref_logits, atol=1e-5)

    print("KERNEL_OK")
</pallas_src>

<mosaic_0001>
module attributes {stable_mosaic.version = 11 : i64} {
  func.func @_fused_kernel(%arg0: i32, %arg1: memref<2x8x32xbf16, #tpu.memory_space<vmem>>, %arg2: memref<1x32xf32, #tpu.memory_space<vmem>>, %arg3: memref<1x1xf32, #tpu.memory_space<smem>>, %arg4: memref<2x8xf32, #tpu.memory_space<vmem>>, %arg5: memref<2x1xf32, #tpu.memory_space<vmem>>) attributes {dimension_semantics = [#tpu.dimension_semantics<parallel>], iteration_bounds = array<i64: 1>, scalar_prefetch = 0 : i64, scratch_operands = 0 : i64, tpu.core_type = #tpu.core_type<tc>, window_params = [{transform_indices = @transform_0, window_bounds = array<i64: 2, 8, 32>}, {pipeline_mode = #tpu.pipeline_mode<synchronous>, transform_indices = @transform_1, window_bounds = array<i64: 1, 32>}, {transform_indices = @transform_2, window_bounds = array<i64: 1, 1>}, {transform_indices = @transform_3, window_bounds = array<i64: 2, 8>}, {transform_indices = @transform_4, window_bounds = array<i64: 2, 1>}]} {
    %c0 = arith.constant 0 : index
    %c0_0 = arith.constant 0 : index
    %c0_1 = arith.constant 0 : index
    %0 = vector.load %arg1[%c0, %c0_0, %c0_1] : memref<2x8x32xbf16, #tpu.memory_space<vmem>>, vector<2x8x32xbf16>
    %1 = arith.extf %0 : vector<2x8x32xbf16> to vector<2x8x32xf32>
    %c0_2 = arith.constant 0 : index
    %c0_3 = arith.constant 0 : index
    %2 = vector.load %arg2[%c0_2, %c0_3] : memref<1x32xf32, #tpu.memory_space<vmem>>, vector<1x32xf32>
    %3 = vector.shape_cast %2 : vector<1x32xf32> to vector<1x1x32xf32>
    %4 = vector.broadcast %3 : vector<1x1x32xf32> to vector<2x8x32xf32>
    %5 = arith.mulf %1, %4 : vector<2x8x32xf32>
    %cst = arith.constant dense<0.000000e+00> : vector<2x8xf32>
    %6 = vector.multi_reduction <add>, %5, %cst [2] : vector<2x8x32xf32> to vector<2x8xf32>
    %c0_4 = arith.constant 0 : index
    %c0_5 = arith.constant 0 : index
    %7 = memref.load %arg3[%c0_4, %c0_5] : memref<1x1xf32, #tpu.memory_space<smem>>
    %8 = vector.broadcast %7 : f32 to vector<2x8xf32>
    %9 = arith.addf %6, %8 : vector<2x8xf32>
    %c0_6 = arith.constant 0 : index
    %c0_7 = arith.constant 0 : index
    %10 = vector.load %arg4[%c0_6, %c0_7] : memref<2x8xf32, #tpu.memory_space<vmem>>, vector<2x8xf32>
    tpu.vector_store %arg4[%c0_6, %c0_7], %9 {strides = array<i32>} : memref<2x8xf32, #tpu.memory_space<vmem>>, vector<2x8xf32>,
    %cst_8 = arith.constant dense<0xFF800000> : vector<2xf32>
    %11 = vector.multi_reduction <maximumf>, %9, %cst_8 [1] : vector<2x8xf32> to vector<2xf32>
    %12 = vector.shape_cast %11 : vector<2xf32> to vector<2x1xf32>
    %13 = vector.broadcast %12 : vector<2x1xf32> to vector<2x8xf32>
    %14 = arith.subf %9, %13 : vector<2x8xf32>
    %15 = math.exp %14 : vector<2x8xf32>
    %cst_9 = arith.constant dense<0.000000e+00> : vector<2xf32>
    %16 = vector.multi_reduction <add>, %15, %cst_9 [1] : vector<2x8xf32> to vector<2xf32>
    %17 = vector.shape_cast %16 : vector<2xf32> to vector<2x1xf32>
    %18 = math.log %17 : vector<2x1xf32>
    %19 = arith.addf %18, %12 : vector<2x1xf32>
    %20 = vector.extract_strided_slice %9 {offsets = [0, 0], sizes = [2, 1], strides = [1, 1]} : vector<2x8xf32> to vector<2x1xf32>
    %21 = arith.subf %19, %20 : vector<2x1xf32>
    %c0_10 = arith.constant 0 : index
    %c0_11 = arith.constant 0 : index
    %22 = vector.load %arg5[%c0_10, %c0_11] : memref<2x1xf32, #tpu.memory_space<vmem>>, vector<2x1xf32>
    tpu.vector_store %arg5[%c0_10, %c0_11], %21 {strides = array<i32>} : memref<2x1xf32, #tpu.memory_space<vmem>>, vector<2x1xf32>,
    return
  }
  func.func @transform_0(%arg0: i32) -> (i32, i32, i32) {
    %c0_i32 = arith.constant 0 : i32
    %c0_i32_0 = arith.constant 0 : i32
    %c0_i32_1 = arith.constant 0 : i32
    return %arg0, %c0_i32, %c0_i32_0 : i32, i32, i32
  }
  func.func @transform_1(%arg0: i32) -> (i32, i32) {
    %c0_i32 = arith.constant 0 : i32
    %c0_i32_0 = arith.constant 0 : i32
    %c0_i32_1 = arith.constant 0 : i32
    return %c0_i32, %c0_i32_0 : i32, i32
  }
  func.func @transform_2(%arg0: i32) -> (i32, i32) {
    %c0_i32 = arith.constant 0 : i32
    %c0_i32_0 = arith.constant 0 : i32
    %c0_i32_1 = arith.constant 0 : i32
    return %c0_i32, %c0_i32_0 : i32, i32
  }
  func.func @transform_3(%arg0: i32) -> (i32, i32) {
    %c0_i32 = arith.constant 0 : i32
    %c0_i32_0 = arith.constant 0 : i32
    return %arg0, %c0_i32 : i32, i32
  }
  func.func @transform_4(%arg0: i32) -> (i32, i32) {
    %c0_i32 = arith.constant 0 : i32
    %c0_i32_0 = arith.constant 0 : i32
    return %arg0, %c0_i32 : i32, i32
  }
}

</mosaic_0001>

<llo_original>
// kernel: tpu_custom_call.1
$region0: #{tpu_custom_call.1}
  #allocation0 [shape = 'u32[]', space=smem, size = 0x4, offset = 0x4, fixed_abs, tag = 'smem constant byte address 0x4 - core index']
  #allocation1 [shape = 'u32[144,128]{1,0:T(1,128)}', space=vmem, size = 0x12000, scoped, tag = 'internal scratch']
  #allocation2 [shape = 'f32[1,1]{1,0:T(1,128)S(6)}', space=smem, size = 0x200, scoped, tag = 'scoped memory for tpu_custom_call.1']
  %s0 = inlined_call_operand.hbm [shape: bf16[2,8,32], index: 0, kind: input, shape index: {}]
  %s1 = inlined_call_operand.vmem [shape: f32[1,32], index: 1, kind: input, shape index: {}]
  %s2 = inlined_call_operand.<no memory space> [shape: f32[1,1], index: 2, kind: input, shape index: {}]
  %s3 = inlined_call_operand.hbm [shape: f32[2,8], index: 3, kind: output, shape index: {0}]
  %s4 = inlined_call_operand.vmem [shape: f32[2,1], index: 4, kind: output, shape index: {1}]
  %5 = xla_tuple %s3, %s4
  %s6 = sld [smem:[#allocation0]]
  $region34: #{tpu_custom_call.1} parent=0
    _
  %s8 = ssub.s32 1, %s6
  %s9 = scalar_select 0, %s8, %s6
  %10 = sst [smem:[#allocation2]] %s2
  $region1: #{tpu_custom_call.1} parent=0
    #allocation3 [shape = 'u8[4096]{0}', space=vmem, size = 0x1000, scoped, tag = 'input window, operand 0, single buffered']
    #allocation4 [shape = 's32[1]{0}', space=sflag, size = 0x4, scoped, tag = 'scoped memory for tpu_custom_call.1']
    #allocation5 [shape = 's32[1]{0}', space=sflag, size = 0x4, scoped, tag = 'scoped memory for tpu_custom_call.1']
    #allocation6 [shape = 'u8[1024]{0}', space=vmem, size = 0x400, scoped, tag = 'output window, operand 0, single buffered']
    %11 = vsyncpa [#allocation4], 0
    %12 = vsyncpa [#allocation5], 0
    // Predicated region
    $region2: #{tpu_custom_call.1} parent=1 // pred_check
      _
    $region3: #{tpu_custom_call.1} parent=1 // pred_check_branch
      %14 = sbr.rel (0) target = $region5
    $region4: #{tpu_custom_call.1} parent=1 // pred_region
      %s16 = ssub.s32 128, 128
      %17 = vsyncadd [#allocation4], %s16
      %s18 = sshll.u32 [#allocation3], 4
      %s19 = int_to_ptr.vmem [resolvable:$true] %s18
      %24 = dma.hbm_to_vmem [thread:$0]  %s0, 128, %s19, [#allocation4], 64, 64, 4
    $region5: #{tpu_custom_call.1} parent=1 // pred_fallthru
      _
    // Predicated region
    $region6: #{tpu_custom_call.1} parent=1 // pred_check
      _
    $region7: #{tpu_custom_call.1} parent=1 // pred_check_branch
      %26 = sbr.rel (0) target = $region9
    $region8: #{tpu_custom_call.1} parent=1 // pred_region
      _
    $region9: #{tpu_custom_call.1} parent=1 // pred_fallthru
      _
    // Predicated region
    $region10: #{tpu_custom_call.1} parent=1 // pred_check
      _
    $region11: #{tpu_custom_call.1} parent=1 // pred_check_branch
      %28 = sbr.rel (0) target = $region13
    $region12: #{tpu_custom_call.1} parent=1 // pred_region
      _
    $region13: #{tpu_custom_call.1} parent=1 // pred_fallthru
      _
    // Predicated region
    $region14: #{tpu_custom_call.1} parent=1 // pred_check
      _
    $region15: #{tpu_custom_call.1} parent=1 // pred_check_branch
      %30 = sbr.rel (0) target = $region17
    $region16: #{tpu_custom_call.1} parent=1 // pred_region
      %31 = dma.done [#allocation4], 128
    $region17: #{tpu_custom_call.1} parent=1 // pred_fallthru
      _
    %v32 = vld [vmem:[#allocation3] sm:$0xf]
    %v33 = vld [vmem:[#allocation3 + $0x4] sm:$0xf]
    %v34 = vunpack.c.l.bf16 %v32
    %v35 = vunpack.c.l.bf16 %v33
    %v36 = vld [vmem:[%s1] sm:$0x1]
    %v38 = vlaneseq
    %v39 = vshrl.u32 %v38, 7
    %v40 = vsub.s32 0, %v39
    %v41 = vrot.slane %v36, %v40
    %v43 = vmul.f32 %v34, %v41
    %v44 = vmul.f32 %v35, %v41
    %vm45 = vcmask 261120
    %v46 = vsel %vm45, %v43, 0.0
    %47 = vadd.xlane.f32.xlu0 %v46
    %v48 = vpop.xlane.xlu0 %47
    %v49 = vsel %vm45, %v44, 0.0
    %50 = vadd.xlane.f32.xlu0 %v49
    %v51 = vpop.xlane.xlu0 %50
    %s52 = sld [smem:[#allocation2]]
    %v53 = vstv %s52
    %v54 = vadd.f32 %v48, %v53
    %v55 = vadd.f32 %v51, %v53
    %v58 = vlaneseq
    %v59 = vand.u32 %v58, 127
    %v60 = vlaneseq
    %v61 = vshrl.u32 %v60, 7
    %v62 = vsub.s32 %v59, %v61
    %v63 = vrot.slane %v54, %v62
    %v64 = vlaneseq
    %v65 = vshrl.u32 %v64, 7
    %v66 = vsub.s32 %v59, %v65
    %v67 = vrot.slane %v55, %v66
    %vm68 = vcmask 1041409
    %v69 = vsel %vm68, %v67, %v63
    %vm71 = vcmask 58368
    %72 = vst.msk [vmem:[#allocation6] sm:$0x3] %vm71, %v69
    %v73 = vsel %vm71, %v69, -inf
    %74 = vmax.xlane.f32.xlu0 %v73
    %v75 = vpop.xlane.xlu0 %74
    %v77 = vlaneseq
    %v78 = vshrl.u32 %v77, 7
    %v79 = vsub.s32 0, %v78
    %v80 = vrot.slane %v75, %v79
    %v81 = vlaneseq
    %v82 = vshrl.u32 %v81, 7
    %v83 = vsub.s32 1, %v82
    %v84 = vrot.slane %v75, %v83
    %v87 = vsub.f32 %v54, %v80
    %v88 = vsub.f32 %v55, %v84
    %v89 = vmul.f32 %v87, 1.442695
    %v90 = vpow.pop %v89
    %v91 = vmul.f32 %v88, 1.442695
    %v92 = vpow.pop %v91
    %95 = vset.pattern.permute.xlu0 0
    %96 = vperm.xlu0 %95, %v90
    %v97 = vpop.permute.xlu0 %96
    %98 = vset.pattern.permute.xlu0 0
    %99 = vperm.xlu0 %98, %v92
    %v100 = vpop.permute.xlu0 %99
    %v101 = vlaneseq
    %v102 = vshrl.u32 %v101, 7
    %v103 = vsub.s32 %v59, %v102
    %v104 = vrot.slane %v97, %v103
    %v105 = vlaneseq
    %v106 = vshrl.u32 %v105, 7
    %v107 = vsub.s32 %v59, %v106
    %v108 = vrot.slane %v100, %v107
    %v109 = vsel %vm68, %v108, %v104
    %v111 = vsel %vm71, %v109, 0.0
    %112 = vadd.xlane.f32.xlu0 %v111
    %v113 = vpop.xlane.xlu0 %112
    %v114 = vlog2.pop %v113
    %v115 = vmul.f32 %v114, 0.6931472
    %v116 = vadd.f32 %v115, %v75
    %v117 = vrot.slane %v55, 7
    %v118 = vsel %vm68, %v117, %v54
    %v120 = vsub.f32 %v116, %v118
    %vm121 = vcmask 1024
    %122 = vst.msk [vmem:[%s4] sm:$0x3] %vm121, %v120
    // Predicated region
    $region18: #{tpu_custom_call.1} parent=1 // pred_check
      _
    $region19: #{tpu_custom_call.1} parent=1 // pred_check_branch
      %124 = sbr.rel (0) target = $region21
    $region20: #{tpu_custom_call.1} parent=1 // pred_region
      %s126 = ssub.s32 32, 32
      %127 = vsyncadd [#allocation5], %s126
      %s129 = sshll.u32 [#allocation6], 4
      %s130 = int_to_ptr.vmem [resolvable:$true] %s129
      %132 = dma.vmem_to_hbm [thread:$0]  %s130, 32, %s3, [#allocation5]
    $region21: #{tpu_custom_call.1} parent=1 // pred_fallthru
      _
    // Predicated region
    $region22: #{tpu_custom_call.1} parent=1 // pred_check
      _
    $region23: #{tpu_custom_call.1} parent=1 // pred_check_branch
      %134 = sbr.rel (0) target = $region25
    $region24: #{tpu_custom_call.1} parent=1 // pred_region
      _
    $region25: #{tpu_custom_call.1} parent=1 // pred_fallthru
      _
    // Predicated region
    $region26: #{tpu_custom_call.1} parent=1 // pred_check
      _
    $region27: #{tpu_custom_call.1} parent=1 // pred_check_branch
      %136 = sbr.rel (0) target = $region29
    $region28: #{tpu_custom_call.1} parent=1 // pred_region
      %137 = dma.done [#allocation5], 32
    $region29: #{tpu_custom_call.1} parent=1 // pred_fallthru
      _
    // Predicated region
    $region30: #{tpu_custom_call.1} parent=1 // pred_check
      _
    $region31: #{tpu_custom_call.1} parent=1 // pred_check_branch
      %139 = sbr.rel (0) target = $region33
    $region32: #{tpu_custom_call.1} parent=1 // pred_region
      _
    $region33: #{tpu_custom_call.1} parent=1 // pred_fallthru
      _
    %140 = vsyncpa [#allocation4], 1
    %141 = vsyncpa [#allocation5], 1

</llo_original>
